<compile_context>
chip_gen: v7x
topology: tpu7x:2x2x1
jax: 0.10.0
libtpu: 0.0.40
codegen_flags: <defaults>
</compile_context>

<pallas_src>
import numpy as np
import jax
import jax.numpy as jnp
from jax.experimental import pallas as pl
from jax.experimental.pallas import tpu as pltpu


# ----------------------------- in-kernel math helpers -----------------------------

def _erf(x):
    # Abramowitz & Stegun 7.1.26 polynomial approximation of erf (|err| < 1.5e-7),
    # built from exp / reciprocal / mul / add so it lowers onto the VPU + EUP.
    a1, a2, a3, a4, a5 = 0.254829592, -0.284496736, 1.421413741, -1.453152027, 1.061405429
    p = 0.3275911
    s = jnp.where(x >= 0.0, 1.0, -1.0)
    ax = jnp.abs(x)
    t = pl.reciprocal(1.0 + p * ax, approx=True)     # EUP slot, ~free
    poly = ((((a5 * t + a4) * t + a3) * t + a2) * t + a1) * t
    return s * (1.0 - poly * jnp.exp(-ax * ax))      # exp -> EUP


def _gelu_exact(x):
    # matches nn.GELU() default (erf form); computed in f32.
    return 0.5 * x * (1.0 + _erf(x * np.float32(1.0 / np.sqrt(2.0))))


# --------------------------------- Pallas kernels ---------------------------------

def heads_kernel(scale_ref,                               # SMEM (1,) pre-clamped logit scale
                 xv_ref, xt_ref,                          # (TB, Dv), (TB, Dt) bf16 features
                 v_w1_ref, v_b1_ref, v_lng_ref, v_lnb_ref, v_w2_ref, v_b2_ref,
                 t_w1_ref, t_b1_ref, t_lng_ref, t_lnb_ref, t_w2_ref, t_b2_ref,
                 vproj_ref, tproj_ref, vns_ref, tn_ref):
    """Both projection heads (eval BN pre-folded into Linear2) + L2-norm (+scale fold)."""

    def head(x_ref, w1_ref, b1_ref, lng_ref, lnb_ref, w2_ref, b2_ref):
        # Linear 1: bf16 operands on the MXU, f32 accumulation.
        h = jnp.dot(x_ref[...], w1_ref[...],
                    preferred_element_type=jnp.float32) + b1_ref[...]
        # One-pass LayerNorm (eps=1e-5, biased variance), f32 statistics.
        inv_d = np.float32(1.0 / h.shape[-1])
        mu = jnp.sum(h, axis=-1, keepdims=True) * inv_d
        ex2 = jnp.sum(h * h, axis=-1, keepdims=True) * inv_d
        var = ex2 - mu * mu
        h = (h - mu) * jax.lax.rsqrt(var + 1e-5)
        h = h * lng_ref[...] + lnb_ref[...]
        # GELU (exact / erf form), f32.
        h = _gelu_exact(h)
        # Linear 2: eval-mode BatchNorm1d already folded into w2/b2; bf16 operands.
        return jnp.dot(h.astype(jnp.bfloat16), w2_ref[...],
                       preferred_element_type=jnp.float32) + b2_ref[...]

    vproj = head(xv_ref, v_w1_ref, v_b1_ref, v_lng_ref, v_lnb_ref, v_w2_ref, v_b2_ref)
    tproj = head(xt_ref, t_w1_ref, t_b1_ref, t_lng_ref, t_lnb_ref, t_w2_ref, t_b2_ref)
    vproj_ref[...] = vproj
    tproj_ref[...] = tproj

    # F.normalize(p=2, dim=1): x * rsqrt(max(sum_sq, 1e-24)); clamped logit scale folded
    # into the vision side so the similarity kernel needs no post-matmul scaling.
    scale = scale_ref[0]
    v_inv = jax.lax.rsqrt(jnp.maximum(jnp.sum(vproj * vproj, axis=-1, keepdims=True), 1e-24))
    t_inv = jax.lax.rsqrt(jnp.maximum(jnp.sum(tproj * tproj, axis=-1, keepdims=True), 1e-24))
    vns_ref[...] = vproj * (scale * v_inv)
    tn_ref[...] = tproj * t_inv


def similarity_kernel(vns_ref, tn_ref, sim_ref):
    """One (TILE_I, TILE_J) output tile of scale * (vn @ tn.T); scale already folded."""
    # TODO(synk): at large tiles, inspect lowered MLIR for an XLU transpose feeding this
    # dot_general; if present, emit tn transposed (P, B) from heads_kernel instead.
    sim_ref[...] = jax.lax.dot_general(
        vns_ref[...], tn_ref[...], (((1,), (1,)), ((), ())),
        preferred_element_type=jnp.float32)


# ----------------------------------- wrappers --------------------------------------

_PACKED_KEYS = ("w1", "b1", "ln_g", "ln_b", "w2", "b2")


def fold_and_pack_head_params(p, eps=1e-5):
    """One-time host-side prep: fold eval BatchNorm1d into Linear2; weights -> bf16.

    BN folding (exact for eval mode with running stats):
        inv = bn_g / sqrt(bn_v + eps);  w2' = w2 * inv;  b2' = (b2 - bn_m) * inv + bn_b
    Weights are stored bf16 (MXU-native rate, half the DMA/VMEM bytes); biases/LN stay f32.
    """
    inv = jnp.asarray(p["bn_g"], jnp.float32) * jax.lax.rsqrt(
        jnp.asarray(p["bn_v"], jnp.float32) + eps)
    w2f = jnp.asarray(p["w2"], jnp.float32) * inv[None, :]
    b2f = (jnp.asarray(p["b2"], jnp.float32) - jnp.asarray(p["bn_m"], jnp.float32)) * inv \
        + jnp.asarray(p["bn_b"], jnp.float32)
    return dict(
        w1=jnp.asarray(p["w1"], jnp.float32).astype(jnp.bfloat16),
        b1=jnp.asarray(p["b1"], jnp.float32).reshape(1, -1),
        ln_g=jnp.asarray(p["ln_g"], jnp.float32).reshape(1, -1),
        ln_b=jnp.asarray(p["ln_b"], jnp.float32).reshape(1, -1),
        w2=w2f.astype(jnp.bfloat16),
        b2=b2f.reshape(1, -1),
    )
    # TODO(synk): on v7x consider fp8 weights with per-channel scales folded like BN.


def dual_encoder_forward(vision_features, text_features, vis_packed, txt_packed,
                         logit_scale, *, tile_b=None, tile_bb=None):
    """Fused forward: batch-tiled projection heads + separately tiled similarity matmul."""
    B, Dv = vision_features.shape
    Dt = text_features.shape[1]
    P = vis_packed["w2"].shape[1]

    # Batch tile for the heads (weights stay VMEM-resident via constant index_maps).
    tile_b = B if tile_b is None else tile_b
    assert B % tile_b == 0 and (tile_b % 8 == 0 or tile_b == B)

    # exp + clamp of the (possibly learnable/traced) logit scale: on device, outside kernel.
    clamped_scale = jnp.clip(jnp.exp(jnp.asarray(logit_scale, jnp.float32)),
                             1.0, 100.0).reshape(1)

    # Activations pre-cast to bf16 once at the kernel boundary (MXU operands).
    xv = vision_features.astype(jnp.bfloat16)
    xt = text_features.astype(jnp.bfloat16)

    smem = pl.BlockSpec(memory_space=pltpu.MemorySpace.SMEM)
    act_v = pl.BlockSpec((tile_b, Dv), lambda i: (i, 0))
    act_t = pl.BlockSpec((tile_b, Dt), lambda i: (i, 0))
    out_p = pl.BlockSpec((tile_b, P), lambda i: (i, 0))

    def const2d(shape):   # weight / bias / LN tensors: fetched once, VMEM-resident
        return pl.BlockSpec(shape, lambda i: (0, 0))

    def head_specs(d_in):
        return [const2d((d_in, d_in)), const2d((1, d_in)), const2d((1, d_in)),
                const2d((1, d_in)), const2d((d_in, P)), const2d((1, P))]

    vproj, tproj, vns, tn = pl.pallas_call(
        heads_kernel,
        out_shape=(jax.ShapeDtypeStruct((B, P), jnp.float32),
                   jax.ShapeDtypeStruct((B, P), jnp.float32),
                   jax.ShapeDtypeStruct((B, P), jnp.float32),
                   jax.ShapeDtypeStruct((B, P), jnp.float32)),
        grid_spec=pltpu.PrefetchScalarGridSpec(
            num_scalar_prefetch=0,
            grid=(B // tile_b,),
            in_specs=[smem, act_v, act_t] + head_specs(Dv) + head_specs(Dt),
            out_specs=(out_p, out_p, out_p, out_p)),
        compiler_params=pltpu.CompilerParams(
            dimension_semantics=("parallel",),     # shards batch tiles across TCs (v7x)
            # TODO(synk): at realistic sizes raise toward ~100 MiB on v5e/v6e and budget
            # bf16 weights + double-buffered activation tiles <= ~48 MiB on v7x.
            vmem_limit_bytes=32 * 1024 * 1024),
    )(clamped_scale, xv, xt,
      *[vis_packed[k] for k in _PACKED_KEYS],
      *[txt_packed[k] for k in _PACKED_KEYS])

    # Similarity as its own 2D-tiled matmul (output tiles lane-dense once B >= 128;
    # at the toy B=8 it degenerates to a single (B, B) tile).
    tile_bb = min(B, 128) if tile_bb is None else tile_bb
    assert B % tile_bb == 0 and (tile_bb % 8 == 0 or tile_bb == B)
    sim = pl.pallas_call(
        similarity_kernel,
        out_shape=jax.ShapeDtypeStruct((B, B), jnp.float32),
        grid_spec=pltpu.PrefetchScalarGridSpec(
            num_scalar_prefetch=0,
            grid=(B // tile_bb, B // tile_bb),
            in_specs=[pl.BlockSpec((tile_bb, P), lambda i, j: (i, 0)),
                      pl.BlockSpec((tile_bb, P), lambda i, j: (j, 0))],
            out_specs=pl.BlockSpec((tile_bb, tile_bb), lambda i, j: (i, j))),
        compiler_params=pltpu.CompilerParams(
            dimension_semantics=("parallel", "parallel")),
    )(vns, tn)

    return {"vision_features": vproj, "text_features": tproj, "similarity": sim}


# ------------------------------ deterministic params -------------------------------

def orthogonal_init(key, shape, gain=1.2):
    """Deterministic orthogonal-ish init (mirrors nn.init.orthogonal_(gain=1.2))."""
    rows, cols = shape
    n = max(rows, cols)
    a = jax.random.normal(key, (n, n), jnp.float32)
    q, _ = jnp.linalg.qr(a)
    return gain * q[:rows, :cols]


def make_head_params(key, d_in, d_out):
    k1, k2 = jax.random.split(key)
    return dict(
        w1=orthogonal_init(k1, (d_in, d_in)), b1=jnp.zeros((d_in,)),
        ln_g=jnp.ones((d_in,)), ln_b=jnp.zeros((d_in,)),
        w2=orthogonal_init(k2, (d_in, d_out)), b2=jnp.zeros((d_out,)),
        bn_g=jnp.ones((d_out,)), bn_b=jnp.zeros((d_out,)),
        bn_m=jnp.zeros((d_out,)), bn_v=jnp.ones((d_out,)),
    )


# ------------------------------------ reference -------------------------------------

def ref_head(x, p):
    h = x @ p["w1"] + p["b1"]
    mu = h.mean(-1, keepdims=True)
    var = ((h - mu) ** 2).mean(-1, keepdims=True)
    h = (h - mu) / jnp.sqrt(var + 1e-5) * p["ln_g"] + p["ln_b"]
    h = 0.5 * h * (1.0 + jax.scipy.special.erf(h / np.sqrt(2.0)))
    z = h @ p["w2"] + p["b2"]
    return (z - p["bn_m"]) / jnp.sqrt(p["bn_v"] + 1e-5) * p["bn_g"] + p["bn_b"]


def ref_similarity(v, t, logit_scale):
    vn = v / jnp.maximum(jnp.linalg.norm(v, axis=1, keepdims=True), 1e-12)
    tn = t / jnp.maximum(jnp.linalg.norm(t, axis=1, keepdims=True), 1e-12)
    return jnp.clip(jnp.exp(logit_scale), 1.0, 100.0) * (vn @ tn.T)


# --------------------------------------- main ---------------------------------------

if __name__ == "__main__":
    key = jax.random.PRNGKey(0)
    ks = jax.random.split(key, 8)

    B, C, H, W = 8, 3, 16, 16
    SEQ, VOCAB = 12, 100
    VIS_DIM, TXT_DIM, PROJ_DIM = 128, 128, 128

    # inputs
    images = jax.random.normal(ks[0], (B, C, H, W), jnp.float32)          # NCHW
    token_ids = jax.random.randint(ks[1], (B, SEQ), 0, VOCAB)

    # synthetic backbones (stand-ins for the injected vision_model / text_model) — glue
    w_vis_backbone = 0.02 * jax.random.normal(ks[2], (C * H * W, VIS_DIM), jnp.float32)
    embed_tbl = 0.5 * jax.random.normal(ks[3], (VOCAB, TXT_DIM), jnp.float32)
    vision_features = images.reshape(B, -1) @ w_vis_backbone              # (B, VIS_DIM)
    text_features = jnp.mean(embed_tbl[token_ids], axis=1)                # (B, TXT_DIM)

    # DualEncoder parameters (raw) + one-time host prep (BN folding, bf16 cast, reshape)
    vis_params = make_head_params(ks[4], VIS_DIM, PROJ_DIM)
    txt_params = make_head_params(ks[5], TXT_DIM, PROJ_DIM)
    logit_scale = float(np.log(1.0 / 0.07))

    vis_packed = fold_and_pack_head_params(vis_params)
    txt_packed = fold_and_pack_head_params(txt_params)

    # forward pass (eval mode)
    # TODO(synk): training-mode branches (batch-stat BatchNorm, variance rescaling,
    # low-var-dim diagnostics) are intentionally not implemented.
    outputs = dual_encoder_forward(vision_features, text_features,
                                   vis_packed, txt_packed, logit_scale)
    jax.block_until_ready(outputs)

    # correctness check vs a pure-JAX f32 reference with unfolded BN (verifies the fold).
    # Tolerances are loosened vs the previous all-f32 version because MXU operands are bf16.
    v_ref = ref_head(vision_features, vis_params)
    t_ref = ref_head(text_features, txt_params)
    s_ref = ref_similarity(v_ref, t_ref, logit_scale)
    np.testing.assert_allclose(np.asarray(outputs["vision_features"]), np.asarray(v_ref),
                               rtol=2e-2, atol=5e-2)
    np.testing.assert_allclose(np.asarray(outputs["text_features"]), np.asarray(t_ref),
                               rtol=2e-2, atol=5e-2)
    np.testing.assert_allclose(np.asarray(outputs["similarity"]), np.asarray(s_ref),
                               rtol=2e-2, atol=1e-1)

    print("KERNEL_OK")
</pallas_src>

<mosaic_0001>
module attributes {stable_mosaic.version = 11 : i64} {
  func.func @heads_kernel(%arg0: i32, %arg1: memref<1xf32, #tpu.memory_space<smem>>, %arg2: memref<8x128xbf16, #tpu.memory_space<vmem>>, %arg3: memref<8x128xbf16, #tpu.memory_space<vmem>>, %arg4: memref<128x128xbf16, #tpu.memory_space<vmem>>, %arg5: memref<1x128xf32, #tpu.memory_space<vmem>>, %arg6: memref<1x128xf32, #tpu.memory_space<vmem>>, %arg7: memref<1x128xf32, #tpu.memory_space<vmem>>, %arg8: memref<128x128xbf16, #tpu.memory_space<vmem>>, %arg9: memref<1x128xf32, #tpu.memory_space<vmem>>, %arg10: memref<128x128xbf16, #tpu.memory_space<vmem>>, %arg11: memref<1x128xf32, #tpu.memory_space<vmem>>, %arg12: memref<1x128xf32, #tpu.memory_space<vmem>>, %arg13: memref<1x128xf32, #tpu.memory_space<vmem>>, %arg14: memref<128x128xbf16, #tpu.memory_space<vmem>>, %arg15: memref<1x128xf32, #tpu.memory_space<vmem>>, %arg16: memref<8x128xf32, #tpu.memory_space<vmem>>, %arg17: memref<8x128xf32, #tpu.memory_space<vmem>>, %arg18: memref<8x128xf32, #tpu.memory_space<vmem>>, %arg19: memref<8x128xf32, #tpu.memory_space<vmem>>) attributes {dimension_semantics = [#tpu.dimension_semantics<parallel>], iteration_bounds = array<i64: 1>, scalar_prefetch = 0 : i64, scratch_operands = 0 : i64, tpu.core_type = #tpu.core_type<tc>, window_params = [{transform_indices = @transform_0, window_bounds = array<i64: 1>}, {transform_indices = @transform_1, window_bounds = array<i64: 8, 128>}, {transform_indices = @transform_2, window_bounds = array<i64: 8, 128>}, {pipeline_mode = #tpu.pipeline_mode<synchronous>, transform_indices = @transform_3, window_bounds = array<i64: 128, 128>}, {pipeline_mode = #tpu.pipeline_mode<synchronous>, transform_indices = @transform_4, window_bounds = array<i64: 1, 128>}, {pipeline_mode = #tpu.pipeline_mode<synchronous>, transform_indices = @transform_5, window_bounds = array<i64: 1, 128>}, {pipeline_mode = #tpu.pipeline_mode<synchronous>, transform_indices = @transform_6, window_bounds = array<i64: 1, 128>}, {pipeline_mode = #tpu.pipeline_mode<synchronous>, transform_indices = @transform_7, window_bounds = array<i64: 128, 128>}, {pipeline_mode = #tpu.pipeline_mode<synchronous>, transform_indices = @transform_8, window_bounds = array<i64: 1, 128>}, {pipeline_mode = #tpu.pipeline_mode<synchronous>, transform_indices = @transform_9, window_bounds = array<i64: 128, 128>}, {pipeline_mode = #tpu.pipeline_mode<synchronous>, transform_indices = @transform_10, window_bounds = array<i64: 1, 128>}, {pipeline_mode = #tpu.pipeline_mode<synchronous>, transform_indices = @transform_11, window_bounds = array<i64: 1, 128>}, {pipeline_mode = #tpu.pipeline_mode<synchronous>, transform_indices = @transform_12, window_bounds = array<i64: 1, 128>}, {pipeline_mode = #tpu.pipeline_mode<synchronous>, transform_indices = @transform_13, window_bounds = array<i64: 128, 128>}, {pipeline_mode = #tpu.pipeline_mode<synchronous>, transform_indices = @transform_14, window_bounds = array<i64: 1, 128>}, {transform_indices = @transform_15, window_bounds = array<i64: 8, 128>}, {transform_indices = @transform_16, window_bounds = array<i64: 8, 128>}, {transform_indices = @transform_17, window_bounds = array<i64: 8, 128>}, {transform_indices = @transform_18, window_bounds = array<i64: 8, 128>}]} {
    %c0 = arith.constant 0 : index
    %c0_0 = arith.constant 0 : index
    %0 = vector.load %arg2[%c0, %c0_0] : memref<8x128xbf16, #tpu.memory_space<vmem>>, vector<8x128xbf16>
    %c0_1 = arith.constant 0 : index
    %c0_2 = arith.constant 0 : index
    %1 = vector.load %arg4[%c0_1, %c0_2] : memref<128x128xbf16, #tpu.memory_space<vmem>>, vector<128x128xbf16>
    %cst = arith.constant dense<0.000000e+00> : vector<8x128xf32>
    %2 = tpu.matmul %0, %1, %cst {dimension_numbers = #tpu.dot_dimension_numbers<[1], [0], [0], [1], [0, 0, 1, 1], [], []>} : vector<8x128xbf16>, vector<128x128xbf16>, vector<8x128xf32> -> vector<8x128xf32>
    %c0_3 = arith.constant 0 : index
    %c0_4 = arith.constant 0 : index
    %3 = vector.load %arg5[%c0_3, %c0_4] : memref<1x128xf32, #tpu.memory_space<vmem>>, vector<1x128xf32>
    %4 = vector.broadcast %3 : vector<1x128xf32> to vector<8x128xf32>
    %5 = arith.addf %2, %4 : vector<8x128xf32>
    %cst_5 = arith.constant dense<0.000000e+00> : vector<8xf32>
    %6 = vector.multi_reduction <add>, %5, %cst_5 [1] : vector<8x128xf32> to vector<8xf32>
    %7 = vector.shape_cast %6 : vector<8xf32> to vector<8x1xf32>
    %cst_6 = arith.constant 7.812500e-03 : f32
    %8 = vector.broadcast %cst_6 : f32 to vector<8x1xf32>
    %9 = arith.mulf %7, %8 : vector<8x1xf32>
    %10 = arith.mulf %5, %5 : vector<8x128xf32>
    %cst_7 = arith.constant dense<0.000000e+00> : vector<8xf32>
    %11 = vector.multi_reduction <add>, %10, %cst_7 [1] : vector<8x128xf32> to vector<8xf32>
    %12 = vector.shape_cast %11 : vector<8xf32> to vector<8x1xf32>
    %cst_8 = arith.constant 7.812500e-03 : f32
    %13 = vector.broadcast %cst_8 : f32 to vector<8x1xf32>
    %14 = arith.mulf %12, %13 : vector<8x1xf32>
    %15 = arith.mulf %9, %9 : vector<8x1xf32>
    %16 = arith.subf %14, %15 : vector<8x1xf32>
    %17 = vector.broadcast %9 : vector<8x1xf32> to vector<8x128xf32>
    %18 = arith.subf %5, %17 : vector<8x128xf32>
    %cst_9 = arith.constant 9.99999974E-6 : f32
    %19 = vector.broadcast %cst_9 : f32 to vector<8x1xf32>
    %20 = arith.addf %16, %19 : vector<8x1xf32>
    %21 = math.rsqrt %20 : vector<8x1xf32>
    %22 = vector.broadcast %21 : vector<8x1xf32> to vector<8x128xf32>
    %23 = arith.mulf %18, %22 : vector<8x128xf32>
    %c0_10 = arith.constant 0 : index
    %c0_11 = arith.constant 0 : index
    %24 = vector.load %arg6[%c0_10, %c0_11] : memref<1x128xf32, #tpu.memory_space<vmem>>, vector<1x128xf32>
    %25 = vector.broadcast %24 : vector<1x128xf32> to vector<8x128xf32>
    %26 = arith.mulf %23, %25 : vector<8x128xf32>
    %c0_12 = arith.constant 0 : index
    %c0_13 = arith.constant 0 : index
    %27 = vector.load %arg7[%c0_12, %c0_13] : memref<1x128xf32, #tpu.memory_space<vmem>>, vector<1x128xf32>
    %28 = vector.broadcast %27 : vector<1x128xf32> to vector<8x128xf32>
    %29 = arith.addf %26, %28 : vector<8x128xf32>
    %cst_14 = arith.constant 5.000000e-01 : f32
    %30 = vector.broadcast %cst_14 : f32 to vector<8x128xf32>
    %31 = arith.mulf %30, %29 : vector<8x128xf32>
    %cst_15 = arith.constant 0.707106769 : f32
    %32 = vector.broadcast %cst_15 : f32 to vector<8x128xf32>
    %33 = arith.mulf %29, %32 : vector<8x128xf32>
    %cst_16 = arith.constant 0.000000e+00 : f32
    %34 = vector.broadcast %cst_16 : f32 to vector<8x128xf32>
    %35 = arith.cmpf oge, %33, %34 : vector<8x128xf32>
    %cst_17 = arith.constant 1.000000e+00 : f32
    %cst_18 = arith.constant -1.000000e+00 : f32
    %36 = vector.broadcast %cst_17 : f32 to vector<8x128xf32>
    %37 = vector.broadcast %cst_18 : f32 to vector<8x128xf32>
    %38 = arith.select %35, %36, %37 : vector<8x128xi1>, vector<8x128xf32>
    %39 = math.absf %33 : vector<8x128xf32>
    %cst_19 = arith.constant 0.327591091 : f32
    %40 = vector.broadcast %cst_19 : f32 to vector<8x128xf32>
    %41 = arith.mulf %40, %39 : vector<8x128xf32>
    %cst_20 = arith.constant 1.000000e+00 : f32
    %42 = vector.broadcast %cst_20 : f32 to vector<8x128xf32>
    %43 = arith.addf %42, %41 : vector<8x128xf32>
    %44 = tpu.reciprocal %43 {approx = true} : vector<8x128xf32> -> vector<8x128xf32>
    %cst_21 = arith.constant 1.06140542 : f32
    %45 = vector.broadcast %cst_21 : f32 to vector<8x128xf32>
    %46 = arith.mulf %45, %44 : vector<8x128xf32>
    %cst_22 = arith.constant -1.45315206 : f32
    %47 = vector.broadcast %cst_22 : f32 to vector<8x128xf32>
    %48 = arith.addf %46, %47 : vector<8x128xf32>
    %49 = arith.mulf %48, %44 : vector<8x128xf32>
    %cst_23 = arith.constant 1.42141378 : f32
    %50 = vector.broadcast %cst_23 : f32 to vector<8x128xf32>
    %51 = arith.addf %49, %50 : vector<8x128xf32>
    %52 = arith.mulf %51, %44 : vector<8x128xf32>
    %cst_24 = arith.constant -0.284496725 : f32
    %53 = vector.broadcast %cst_24 : f32 to vector<8x128xf32>
    %54 = arith.addf %52, %53 : vector<8x128xf32>
    %55 = arith.mulf %54, %44 : vector<8x128xf32>
    %cst_25 = arith.constant 0.254829586 : f32
    %56 = vector.broadcast %cst_25 : f32 to vector<8x128xf32>
    %57 = arith.addf %55, %56 : vector<8x128xf32>
    %58 = arith.mulf %57, %44 : vector<8x128xf32>
    %cst_26 = arith.constant 0.000000e+00 : f32
    %59 = vector.broadcast %cst_26 : f32 to vector<8x128xf32>
    %60 = arith.subf %59, %39 : vector<8x128xf32>
    %61 = arith.mulf %60, %39 : vector<8x128xf32>
    %62 = math.exp %61 : vector<8x128xf32>
    %63 = arith.mulf %58, %62 : vector<8x128xf32>
    %cst_27 = arith.constant 1.000000e+00 : f32
    %64 = vector.broadcast %cst_27 : f32 to vector<8x128xf32>
    %65 = arith.subf %64, %63 : vector<8x128xf32>
    %66 = arith.mulf %38, %65 : vector<8x128xf32>
    %cst_28 = arith.constant 1.000000e+00 : f32
    %67 = vector.broadcast %cst_28 : f32 to vector<8x128xf32>
    %68 = arith.addf %67, %66 : vector<8x128xf32>
    %69 = arith.mulf %31, %68 : vector<8x128xf32>
    %70 = arith.truncf %69 : vector<8x128xf32> to vector<8x128xbf16>
    %c0_29 = arith.constant 0 : index
    %c0_30 = arith.constant 0 : index
    %71 = vector.load %arg8[%c0_29, %c0_30] : memref<128x128xbf16, #tpu.memory_space<vmem>>, vector<128x128xbf16>
    %cst_31 = arith.constant dense<0.000000e+00> : vector<8x128xf32>
    %72 = tpu.matmul %70, %71, %cst_31 {dimension_numbers = #tpu.dot_dimension_numbers<[1], [0], [0], [1], [0, 0, 1, 1], [], []>} : vector<8x128xbf16>, vector<128x128xbf16>, vector<8x128xf32> -> vector<8x128xf32>
    %c0_32 = arith.constant 0 : index
    %c0_33 = arith.constant 0 : index
    %73 = vector.load %arg9[%c0_32, %c0_33] : memref<1x128xf32, #tpu.memory_space<vmem>>, vector<1x128xf32>
    %74 = vector.broadcast %73 : vector<1x128xf32> to vector<8x128xf32>
    %75 = arith.addf %72, %74 : vector<8x128xf32>
    %c0_34 = arith.constant 0 : index
    %c0_35 = arith.constant 0 : index
    %76 = vector.load %arg3[%c0_34, %c0_35] : memref<8x128xbf16, #tpu.memory_space<vmem>>, vector<8x128xbf16>
    %c0_36 = arith.constant 0 : index
    %c0_37 = arith.constant 0 : index
    %77 = vector.load %arg10[%c0_36, %c0_37] : memref<128x128xbf16, #tpu.memory_space<vmem>>, vector<128x128xbf16>
    %cst_38 = arith.constant dense<0.000000e+00> : vector<8x128xf32>
    %78 = tpu.matmul %76, %77, %cst_38 {dimension_numbers = #tpu.dot_dimension_numbers<[1], [0], [0], [1], [0, 0, 1, 1], [], []>} : vector<8x128xbf16>, vector<128x128xbf16>, vector<8x128xf32> -> vector<8x128xf32>
    %c0_39 = arith.constant 0 : index
    %c0_40 = arith.constant 0 : index
    %79 = vector.load %arg11[%c0_39, %c0_40] : memref<1x128xf32, #tpu.memory_space<vmem>>, vector<1x128xf32>
    %80 = vector.broadcast %79 : vector<1x128xf32> to vector<8x128xf32>
    %81 = arith.addf %78, %80 : vector<8x128xf32>
    %cst_41 = arith.constant dense<0.000000e+00> : vector<8xf32>
    %82 = vector.multi_reduction <add>, %81, %cst_41 [1] : vector<8x128xf32> to vector<8xf32>
    %83 = vector.shape_cast %82 : vector<8xf32> to vector<8x1xf32>
    %cst_42 = arith.constant 7.812500e-03 : f32
    %84 = vector.broadcast %cst_42 : f32 to vector<8x1xf32>
    %85 = arith.mulf %83, %84 : vector<8x1xf32>
    %86 = arith.mulf %81, %81 : vector<8x128xf32>
    %cst_43 = arith.constant dense<0.000000e+00> : vector<8xf32>
    %87 = vector.multi_reduction <add>, %86, %cst_43 [1] : vector<8x128xf32> to vector<8xf32>
    %88 = vector.shape_cast %87 : vector<8xf32> to vector<8x1xf32>
    %cst_44 = arith.constant 7.812500e-03 : f32
    %89 = vector.broadcast %cst_44 : f32 to vector<8x1xf32>
    %90 = arith.mulf %88, %89 : vector<8x1xf32>
    %91 = arith.mulf %85, %85 : vector<8x1xf32>
    %92 = arith.subf %90, %91 : vector<8x1xf32>
    %93 = vector.broadcast %85 : vector<8x1xf32> to vector<8x128xf32>
    %94 = arith.subf %81, %93 : vector<8x128xf32>
    %cst_45 = arith.constant 9.99999974E-6 : f32
    %95 = vector.broadcast %cst_45 : f32 to vector<8x1xf32>
    %96 = arith.addf %92, %95 : vector<8x1xf32>
    %97 = math.rsqrt %96 : vector<8x1xf32>
    %98 = vector.broadcast %97 : vector<8x1xf32> to vector<8x128xf32>
    %99 = arith.mulf %94, %98 : vector<8x128xf32>
    %c0_46 = arith.constant 0 : index
    %c0_47 = arith.constant 0 : index
    %100 = vector.load %arg12[%c0_46, %c0_47] : memref<1x128xf32, #tpu.memory_space<vmem>>, vector<1x128xf32>
    %101 = vector.broadcast %100 : vector<1x128xf32> to vector<8x128xf32>
    %102 = arith.mulf %99, %101 : vector<8x128xf32>
    %c0_48 = arith.constant 0 : index
    %c0_49 = arith.constant 0 : index
    %103 = vector.load %arg13[%c0_48, %c0_49] : memref<1x128xf32, #tpu.memory_space<vmem>>, vector<1x128xf32>
    %104 = vector.broadcast %103 : vector<1x128xf32> to vector<8x128xf32>
    %105 = arith.addf %102, %104 : vector<8x128xf32>
    %cst_50 = arith.constant 5.000000e-01 : f32
    %106 = vector.broadcast %cst_50 : f32 to vector<8x128xf32>
    %107 = arith.mulf %106, %105 : vector<8x128xf32>
    %cst_51 = arith.constant 0.707106769 : f32
    %108 = vector.broadcast %cst_51 : f32 to vector<8x128xf32>
    %109 = arith.mulf %105, %108 : vector<8x128xf32>
    %cst_52 = arith.constant 0.000000e+00 : f32
    %110 = vector.broadcast %cst_52 : f32 to vector<8x128xf32>
    %111 = arith.cmpf oge, %109, %110 : vector<8x128xf32>
    %cst_53 = arith.constant 1.000000e+00 : f32
    %cst_54 = arith.constant -1.000000e+00 : f32
    %112 = vector.broadcast %cst_53 : f32 to vector<8x128xf32>
    %113 = vector.broadcast %cst_54 : f32 to vector<8x128xf32>
    %114 = arith.select %111, %112, %113 : vector<8x128xi1>, vector<8x128xf32>
    %115 = math.absf %109 : vector<8x128xf32>
    %cst_55 = arith.constant 0.327591091 : f32
    %116 = vector.broadcast %cst_55 : f32 to vector<8x128xf32>
    %117 = arith.mulf %116, %115 : vector<8x128xf32>
    %cst_56 = arith.constant 1.000000e+00 : f32
    %118 = vector.broadcast %cst_56 : f32 to vector<8x128xf32>
    %119 = arith.addf %118, %117 : vector<8x128xf32>
    %120 = tpu.reciprocal %119 {approx = true} : vector<8x128xf32> -> vector<8x128xf32>
    %cst_57 = arith.constant 1.06140542 : f32
    %121 = vector.broadcast %cst_57 : f32 to vector<8x128xf32>
    %122 = arith.mulf %121, %120 : vector<8x128xf32>
    %cst_58 = arith.constant -1.45315206 : f32
    %123 = vector.broadcast %cst_58 : f32 to vector<8x128xf32>
    %124 = arith.addf %122, %123 : vector<8x128xf32>
    %125 = arith.mulf %124, %120 : vector<8x128xf32>
    %cst_59 = arith.constant 1.42141378 : f32
    %126 = vector.broadcast %cst_59 : f32 to vector<8x128xf32>
    %127 = arith.addf %125, %126 : vector<8x128xf32>
    %128 = arith.mulf %127, %120 : vector<8x128xf32>
    %cst_60 = arith.constant -0.284496725 : f32
    %129 = vector.broadcast %cst_60 : f32 to vector<8x128xf32>
    %130 = arith.addf %128, %129 : vector<8x128xf32>
    %131 = arith.mulf %130, %120 : vector<8x128xf32>
    %cst_61 = arith.constant 0.254829586 : f32
    %132 = vector.broadcast %cst_61 : f32 to vector<8x128xf32>
    %133 = arith.addf %131, %132 : vector<8x128xf32>
    %134 = arith.mulf %133, %120 : vector<8x128xf32>
    %cst_62 = arith.constant 0.000000e+00 : f32
    %135 = vector.broadcast %cst_62 : f32 to vector<8x128xf32>
    %136 = arith.subf %135, %115 : vector<8x128xf32>
    %137 = arith.mulf %136, %115 : vector<8x128xf32>
    %138 = math.exp %137 : vector<8x128xf32>
    %139 = arith.mulf %134, %138 : vector<8x128xf32>
    %cst_63 = arith.constant 1.000000e+00 : f32
    %140 = vector.broadcast %cst_63 : f32 to vector<8x128xf32>
    %141 = arith.subf %140, %139 : vector<8x128xf32>
    %142 = arith.mulf %114, %141 : vector<8x128xf32>
    %cst_64 = arith.constant 1.000000e+00 : f32
    %143 = vector.broadcast %cst_64 : f32 to vector<8x128xf32>
    %144 = arith.addf %143, %142 : vector<8x128xf32>
    %145 = arith.mulf %107, %144 : vector<8x128xf32>
    %146 = arith.truncf %145 : vector<8x128xf32> to vector<8x128xbf16>
    %c0_65 = arith.constant 0 : index
    %c0_66 = arith.constant 0 : index
    %147 = vector.load %arg14[%c0_65, %c0_66] : memref<128x128xbf16, #tpu.memory_space<vmem>>, vector<128x128xbf16>
    %cst_67 = arith.constant dense<0.000000e+00> : vector<8x128xf32>
    %148 = tpu.matmul %146, %147, %cst_67 {dimension_numbers = #tpu.dot_dimension_numbers<[1], [0], [0], [1], [0, 0, 1, 1], [], []>} : vector<8x128xbf16>, vector<128x128xbf16>, vector<8x128xf32> -> vector<8x128xf32>
    %c0_68 = arith.constant 0 : index
    %c0_69 = arith.constant 0 : index
    %149 = vector.load %arg15[%c0_68, %c0_69] : memref<1x128xf32, #tpu.memory_space<vmem>>, vector<1x128xf32>
    %150 = vector.broadcast %149 : vector<1x128xf32> to vector<8x128xf32>
    %151 = arith.addf %148, %150 : vector<8x128xf32>
    %c0_70 = arith.constant 0 : index
    %c0_71 = arith.constant 0 : index
    %152 = vector.load %arg16[%c0_70, %c0_71] : memref<8x128xf32, #tpu.memory_space<vmem>>, vector<8x128xf32>
    tpu.vector_store %arg16[%c0_70, %c0_71], %75 {strides = array<i32>} : memref<8x128xf32, #tpu.memory_space<vmem>>, vector<8x128xf32>,
    %c0_72 = arith.constant 0 : index
    %c0_73 = arith.constant 0 : index
    %153 = vector.load %arg17[%c0_72, %c0_73] : memref<8x128xf32, #tpu.memory_space<vmem>>, vector<8x128xf32>
    tpu.vector_store %arg17[%c0_72, %c0_73], %151 {strides = array<i32>} : memref<8x128xf32, #tpu.memory_space<vmem>>, vector<8x128xf32>,
    %c0_74 = arith.constant 0 : index
    %154 = memref.load %arg1[%c0_74] : memref<1xf32, #tpu.memory_space<smem>>
    %155 = arith.mulf %75, %75 : vector<8x128xf32>
    %cst_75 = arith.constant dense<0.000000e+00> : vector<8xf32>
    %156 = vector.multi_reduction <add>, %155, %cst_75 [1] : vector<8x128xf32> to vector<8xf32>
    %157 = vector.shape_cast %156 : vector<8xf32> to vector<8x1xf32>
    %cst_76 = arith.constant 1.000000e-24 : f32
    %158 = vector.broadcast %cst_76 : f32 to vector<8x1xf32>
    %159 = arith.maximumf %157, %158 : vector<8x1xf32>
    %160 = math.rsqrt %159 : vector<8x1xf32>
    %161 = arith.mulf %151, %151 : vector<8x128xf32>
    %cst_77 = arith.constant dense<0.000000e+00> : vector<8xf32>
    %162 = vector.multi_reduction <add>, %161, %cst_77 [1] : vector<8x128xf32> to vector<8xf32>
    %163 = vector.shape_cast %162 : vector<8xf32> to vector<8x1xf32>
    %cst_78 = arith.constant 1.000000e-24 : f32
    %164 = vector.broadcast %cst_78 : f32 to vector<8x1xf32>
    %165 = arith.maximumf %163, %164 : vector<8x1xf32>
    %166 = math.rsqrt %165 : vector<8x1xf32>
    %167 = vector.broadcast %154 : f32 to vector<8x1xf32>
    %168 = arith.mulf %167, %160 : vector<8x1xf32>
    %169 = vector.broadcast %168 : vector<8x1xf32> to vector<8x128xf32>
    %170 = arith.mulf %75, %169 : vector<8x128xf32>
    %c0_79 = arith.constant 0 : index
    %c0_80 = arith.constant 0 : index
    %171 = vector.load %arg18[%c0_79, %c0_80] : memref<8x128xf32, #tpu.memory_space<vmem>>, vector<8x128xf32>
    tpu.vector_store %arg18[%c0_79, %c0_80], %170 {strides = array<i32>} : memref<8x128xf32, #tpu.memory_space<vmem>>, vector<8x128xf32>,
    %172 = vector.broadcast %166 : vector<8x1xf32> to vector<8x128xf32>
    %173 = arith.mulf %151, %172 : vector<8x128xf32>
    %c0_81 = arith.constant 0 : index
    %c0_82 = arith.constant 0 : index
    %174 = vector.load %arg19[%c0_81, %c0_82] : memref<8x128xf32, #tpu.memory_space<vmem>>, vector<8x128xf32>
    tpu.vector_store %arg19[%c0_81, %c0_82], %173 {strides = array<i32>} : memref<8x128xf32, #tpu.memory_space<vmem>>, vector<8x128xf32>,
    return
  }
  func.func @transform_0(%arg0: i32) -> i32 {
    %c0_i32 = arith.constant 0 : i32
    %c0_i32_0 = arith.constant 0 : i32
    return %c0_i32 : i32
  }
  func.func @transform_1(%arg0: i32) -> (i32, i32) {
    %c0_i32 = arith.constant 0 : i32
    %c0_i32_0 = arith.constant 0 : i32
    return %arg0, %c0_i32 : i32, i32
  }
  func.func @transform_2(%arg0: i32) -> (i32, i32) {
    %c0_i32 = arith.constant 0 : i32
    %c0_i32_0 = arith.constant 0 : i32
    return %arg0, %c0_i32 : i32, i32
  }
  func.func @transform_3(%arg0: i32) -> (i32, i32) {
    %c0_i32 = arith.constant 0 : i32
    %c0_i32_0 = arith.constant 0 : i32
    %c0_i32_1 = arith.constant 0 : i32
    return %c0_i32, %c0_i32_0 : i32, i32
  }
  func.func @transform_4(%arg0: i32) -> (i32, i32) {
    %c0_i32 = arith.constant 0 : i32
    %c0_i32_0 = arith.constant 0 : i32
    %c0_i32_1 = arith.constant 0 : i32
    return %c0_i32, %c0_i32_0 : i32, i32
  }
  func.func @transform_5(%arg0: i32) -> (i32, i32) {
    %c0_i32 = arith.constant 0 : i32
    %c0_i32_0 = arith.constant 0 : i32
    %c0_i32_1 = arith.constant 0 : i32
    return %c0_i32, %c0_i32_0 : i32, i32
  }
  func.func @transform_6(%arg0: i32) -> (i32, i32) {
    %c0_i32 = arith.constant 0 : i32
    %c0_i32_0 = arith.constant 0 : i32
    %c0_i32_1 = arith.constant 0 : i32
    return %c0_i32, %c0_i32_0 : i32, i32
  }
  func.func @transform_7(%arg0: i32) -> (i32, i32) {
    %c0_i32 = arith.constant 0 : i32
    %c0_i32_0 = arith.constant 0 : i32
    %c0_i32_1 = arith.constant 0 : i32
    return %c0_i32, %c0_i32_0 : i32, i32
  }
  func.func @transform_8(%arg0: i32) -> (i32, i32) {
    %c0_i32 = arith.constant 0 : i32
    %c0_i32_0 = arith.constant 0 : i32
    %c0_i32_1 = arith.constant 0 : i32
    return %c0_i32, %c0_i32_0 : i32, i32
  }
  func.func @transform_9(%arg0: i32) -> (i32, i32) {
    %c0_i32 = arith.constant 0 : i32
    %c0_i32_0 = arith.constant 0 : i32
    %c0_i32_1 = arith.constant 0 : i32
    return %c0_i32, %c0_i32_0 : i32, i32
  }
  func.func @transform_10(%arg0: i32) -> (i32, i32) {
    %c0_i32 = arith.constant 0 : i32
    %c0_i32_0 = arith.constant 0 : i32
    %c0_i32_1 = arith.constant 0 : i32
    return %c0_i32, %c0_i32_0 : i32, i32
  }
  func.func @transform_11(%arg0: i32) -> (i32, i32) {
    %c0_i32 = arith.constant 0 : i32
    %c0_i32_0 = arith.constant 0 : i32
    %c0_i32_1 = arith.constant 0 : i32
    return %c0_i32, %c0_i32_0 : i32, i32
  }
  func.func @transform_12(%arg0: i32) -> (i32, i32) {
    %c0_i32 = arith.constant 0 : i32
    %c0_i32_0 = arith.constant 0 : i32
    %c0_i32_1 = arith.constant 0 : i32
    return %c0_i32, %c0_i32_0 : i32, i32
  }
  func.func @transform_13(%arg0: i32) -> (i32, i32) {
    %c0_i32 = arith.constant 0 : i32
    %c0_i32_0 = arith.constant 0 : i32
    %c0_i32_1 = arith.constant 0 : i32
    return %c0_i32, %c0_i32_0 : i32, i32
  }
  func.func @transform_14(%arg0: i32) -> (i32, i32) {
    %c0_i32 = arith.constant 0 : i32
    %c0_i32_0 = arith.constant 0 : i32
    %c0_i32_1 = arith.constant 0 : i32
    return %c0_i32, %c0_i32_0 : i32, i32
  }
  func.func @transform_15(%arg0: i32) -> (i32, i32) {
    %c0_i32 = arith.constant 0 : i32
    %c0_i32_0 = arith.constant 0 : i32
    return %arg0, %c0_i32 : i32, i32
  }
  func.func @transform_16(%arg0: i32) -> (i32, i32) {
    %c0_i32 = arith.constant 0 : i32
    %c0_i32_0 = arith.constant 0 : i32
    return %arg0, %c0_i32 : i32, i32
  }
  func.func @transform_17(%arg0: i32) -> (i32, i32) {
    %c0_i32 = arith.constant 0 : i32
    %c0_i32_0 = arith.constant 0 : i32
    return %arg0, %c0_i32 : i32, i32
  }
  func.func @transform_18(%arg0: i32) -> (i32, i32) {
    %c0_i32 = arith.constant 0 : i32
    %c0_i32_0 = arith.constant 0 : i32
    return %arg0, %c0_i32 : i32, i32
  }
}

</mosaic_0001>

<llo_original>
// kernel: tpu_custom_call.1
$region0: #{tpu_custom_call.1}
  #allocation0 [shape = 'u32[]', space=smem, size = 0x4, offset = 0x4, fixed_abs, tag = 'smem constant byte address 0x4 - core index']
  #allocation1 [shape = 'u32[144,128]{1,0:T(1,128)}', space=vmem, size = 0x12000, scoped, tag = 'internal scratch']
  #allocation2 [shape = 'f32[1]{0:T(128)S(6)}', space=smem, size = 0x200, scoped, tag = 'scoped memory for tpu_custom_call.1']
  %s0 = inlined_call_operand.<no memory space> [shape: f32[1], index: 0, kind: input, shape index: {}]
  %s1 = inlined_call_operand.hbm [shape: bf16[8,128], index: 1, kind: input, shape index: {}]
  %s2 = inlined_call_operand.vmem [shape: bf16[8,128], index: 2, kind: input, shape index: {}]
  %s3 = inlined_call_operand.hbm [shape: bf16[128,128], index: 3, kind: input, shape index: {}]
  %s4 = inlined_call_operand.vmem [shape: f32[1,128], index: 4, kind: input, shape index: {}]
  %s5 = inlined_call_operand.vmem [shape: f32[1,128], index: 5, kind: input, shape index: {}]
  %s6 = inlined_call_operand.vmem [shape: f32[1,128], index: 6, kind: input, shape index: {}]
  %s7 = inlined_call_operand.hbm [shape: bf16[128,128], index: 7, kind: input, shape index: {}]
  %s8 = inlined_call_operand.vmem [shape: f32[1,128], index: 8, kind: input, shape index: {}]
  %s9 = inlined_call_operand.hbm [shape: bf16[128,128], index: 9, kind: input, shape index: {}]
  %s10 = inlined_call_operand.vmem [shape: f32[1,128], index: 10, kind: input, shape index: {}]
  %s11 = inlined_call_operand.vmem [shape: f32[1,128], index: 11, kind: input, shape index: {}]
  %s12 = inlined_call_operand.vmem [shape: f32[1,128], index: 12, kind: input, shape index: {}]
  %s13 = inlined_call_operand.hbm [shape: bf16[128,128], index: 13, kind: input, shape index: {}]
  %s14 = inlined_call_operand.vmem [shape: f32[1,128], index: 14, kind: input, shape index: {}]
  %s15 = inlined_call_operand.hbm [shape: f32[8,128], index: 15, kind: output, shape index: {0}]
  %s16 = inlined_call_operand.hbm [shape: f32[8,128], index: 16, kind: output, shape index: {1}]
  %s17 = inlined_call_operand.hbm [shape: f32[8,128], index: 17, kind: output, shape index: {2}]
  %s18 = inlined_call_operand.hbm [shape: f32[8,128], index: 18, kind: output, shape index: {3}]
  %19 = xla_tuple %s15, %s16, %s17, %s18
  %s20 = sld [smem:[#allocation0]]
  $region114: #{tpu_custom_call.1} parent=0
    _
  %s22 = ssub.s32 1, %s20
  %s23 = scalar_select 0, %s22, %s20
  %24 = sst [smem:[#allocation2]] %s0
  $region1: #{tpu_custom_call.1} parent=0
    #allocation3 [shape = 'u8[2048]{0}', space=vmem, size = 0x800, scoped, tag = 'input window, operand 1, single buffered']
    #allocation4 [shape = 's32[1]{0}', space=sflag, size = 0x4, scoped, tag = 'scoped memory for tpu_custom_call.1']
    #allocation5 [shape = 's32[1]{0}', space=sflag, size = 0x4, scoped, tag = 'scoped memory for tpu_custom_call.1']
    #allocation6 [shape = 'u8[32768]{0}', space=vmem, size = 0x8000, scoped, tag = 'input window, operand 3, single buffered']
    #allocation7 [shape = 's32[1]{0}', space=sflag, size = 0x4, scoped, tag = 'scoped memory for tpu_custom_call.1']
    #allocation8 [shape = 'u8[32768]{0}', space=vmem, size = 0x8000, scoped, tag = 'input window, operand 7, single buffered']
    #allocation9 [shape = 'u8[32768]{0}', space=vmem, size = 0x8000, scoped, tag = 'input window, operand 9, single buffered']
    #allocation10 [shape = 's32[1]{0}', space=sflag, size = 0x4, scoped, tag = 'scoped memory for tpu_custom_call.1']
    #allocation11 [shape = 'u8[32768]{0}', space=vmem, size = 0x8000, scoped, tag = 'input window, operand 13, single buffered']
    #allocation12 [shape = 'u8[4096]{0}', space=vmem, size = 0x1000, scoped, tag = 'output window, operand 0, single buffered']
    #allocation13 [shape = 'u8[4096]{0}', space=vmem, size = 0x1000, scoped, tag = 'output window, operand 1, single buffered']
    #allocation14 [shape = 's32[1]{0}', space=sflag, size = 0x4, scoped, tag = 'scoped memory for tpu_custom_call.1']
    #allocation15 [shape = 'u8[4096]{0}', space=vmem, size = 0x1000, scoped, tag = 'output window, operand 2, single buffered']
    #allocation16 [shape = 'u8[4096]{0}', space=vmem, size = 0x1000, scoped, tag = 'output window, operand 3, single buffered']
    #allocation17 [shape = 's32[1]{0}', space=sflag, size = 0x4, scoped, tag = 'scoped memory for tpu_custom_call.1']
    %25 = vsyncpa [#allocation4], 0
    %26 = vsyncpa [#allocation7], 0
    %27 = vsyncpa [#allocation10], 0
    %28 = vsyncpa [#allocation5], 0
    %29 = vsyncpa [#allocation14], 0
    %30 = vsyncpa [#allocation17], 0
    // Predicated region
    $region2: #{tpu_custom_call.1} parent=1 // pred_check
      _
    $region3: #{tpu_custom_call.1} parent=1 // pred_check_branch
      %32 = sbr.rel (0) target = $region5
    $region4: #{tpu_custom_call.1} parent=1 // pred_region
      _
    $region5: #{tpu_custom_call.1} parent=1 // pred_fallthru
      _
    // Predicated region
    $region6: #{tpu_custom_call.1} parent=1 // pred_check
      _
    $region7: #{tpu_custom_call.1} parent=1 // pred_check_branch
      %34 = sbr.rel (0) target = $region9
    $region8: #{tpu_custom_call.1} parent=1 // pred_region
      %s36 = ssub.s32 64, 64
      %37 = vsyncadd [#allocation4], %s36
      %s39 = sshll.u32 [#allocation3], 4
      %s40 = int_to_ptr.vmem [resolvable:$true] %s39
      %42 = dma.hbm_to_vmem [thread:$0]  %s1, 64, %s40, [#allocation4]
    $region9: #{tpu_custom_call.1} parent=1 // pred_fallthru
      _
    // Predicated region
    $region10: #{tpu_custom_call.1} parent=1 // pred_check
      _
    $region11: #{tpu_custom_call.1} parent=1 // pred_check_branch
      %44 = sbr.rel (0) target = $region13
    $region12: #{tpu_custom_call.1} parent=1 // pred_region
      _
    $region13: #{tpu_custom_call.1} parent=1 // pred_fallthru
      _
    // Predicated region
    $region14: #{tpu_custom_call.1} parent=1 // pred_check
      _
    $region15: #{tpu_custom_call.1} parent=1 // pred_check_branch
      %46 = sbr.rel (0) target = $region17
    $region16: #{tpu_custom_call.1} parent=1 // pred_region
      %s48 = ssub.s32 1024, 1024
      %49 = vsyncadd [#allocation7], %s48
      %s50 = sshll.u32 [#allocation6], 4
      %s51 = int_to_ptr.vmem [resolvable:$true] %s50
      %56 = dma.hbm_to_vmem [thread:$0]  %s3, 1024, %s51, [#allocation7], 64, 64, 4
    $region17: #{tpu_custom_call.1} parent=1 // pred_fallthru
      _
    // Predicated region
    $region18: #{tpu_custom_call.1} parent=1 // pred_check
      _
    $region19: #{tpu_custom_call.1} parent=1 // pred_check_branch
      %58 = sbr.rel (0) target = $region21
    $region20: #{tpu_custom_call.1} parent=1 // pred_region
      _
    $region21: #{tpu_custom_call.1} parent=1 // pred_fallthru
      _
    // Predicated region
    $region22: #{tpu_custom_call.1} parent=1 // pred_check
      _
    $region23: #{tpu_custom_call.1} parent=1 // pred_check_branch
      %60 = sbr.rel (0) target = $region25
    $region24: #{tpu_custom_call.1} parent=1 // pred_region
      _
    $region25: #{tpu_custom_call.1} parent=1 // pred_fallthru
      _
    // Predicated region
    $region26: #{tpu_custom_call.1} parent=1 // pred_check
      _
    $region27: #{tpu_custom_call.1} parent=1 // pred_check_branch
      %62 = sbr.rel (0) target = $region29
    $region28: #{tpu_custom_call.1} parent=1 // pred_region
      _
    $region29: #{tpu_custom_call.1} parent=1 // pred_fallthru
      _
    // Predicated region
    $region30: #{tpu_custom_call.1} parent=1 // pred_check
      _
    $region31: #{tpu_custom_call.1} parent=1 // pred_check_branch
      %64 = sbr.rel (0) target = $region33
    $region32: #{tpu_custom_call.1} parent=1 // pred_region
      %s66 = ssub.s32 1024, 1024
      %67 = vsyncadd [#allocation7], %s66
      %s68 = sshll.u32 [#allocation8], 4
      %s69 = int_to_ptr.vmem [resolvable:$true] %s68
      %74 = dma.hbm_to_vmem [thread:$0]  %s7, 1024, %s69, [#allocation7], 64, 64, 4
    $region33: #{tpu_custom_call.1} parent=1 // pred_fallthru
      _
    // Predicated region
    $region34: #{tpu_custom_call.1} parent=1 // pred_check
      _
    $region35: #{tpu_custom_call.1} parent=1 // pred_check_branch
      %76 = sbr.rel (0) target = $region37
    $region36: #{tpu_custom_call.1} parent=1 // pred_region
      _
    $region37: #{tpu_custom_call.1} parent=1 // pred_fallthru
      _
    // Predicated region
    $region38: #{tpu_custom_call.1} parent=1 // pred_check
      _
    $region39: #{tpu_custom_call.1} parent=1 // pred_check_branch
      %78 = sbr.rel (0) target = $region41
    $region40: #{tpu_custom_call.1} parent=1 // pred_region
      %s80 = ssub.s32 1024, 1024
      %81 = vsyncadd [#allocation10], %s80
      %s82 = sshll.u32 [#allocation9], 4
      %s83 = int_to_ptr.vmem [resolvable:$true] %s82
      %88 = dma.hbm_to_vmem [thread:$0]  %s9, 1024, %s83, [#allocation10], 64, 64, 4
    $region41: #{tpu_custom_call.1} parent=1 // pred_fallthru
      _
    // Predicated region
    $region42: #{tpu_custom_call.1} parent=1 // pred_check
      _
    $region43: #{tpu_custom_call.1} parent=1 // pred_check_branch
      %90 = sbr.rel (0) target = $region45
    $region44: #{tpu_custom_call.1} parent=1 // pred_region
      _
    $region45: #{tpu_custom_call.1} parent=1 // pred_fallthru
      _
    // Predicated region
    $region46: #{tpu_custom_call.1} parent=1 // pred_check
      _
    $region47: #{tpu_custom_call.1} parent=1 // pred_check_branch
      %92 = sbr.rel (0) target = $region49
    $region48: #{tpu_custom_call.1} parent=1 // pred_region
      _
    $region49: #{tpu_custom_call.1} parent=1 // pred_fallthru
      _
    // Predicated region
    $region50: #{tpu_custom_call.1} parent=1 // pred_check
      _
    $region51: #{tpu_custom_call.1} parent=1 // pred_check_branch
      %94 = sbr.rel (0) target = $region53
    $region52: #{tpu_custom_call.1} parent=1 // pred_region
      _
    $region53: #{tpu_custom_call.1} parent=1 // pred_fallthru
      _
    // Predicated region
    $region54: #{tpu_custom_call.1} parent=1 // pred_check
      _
    $region55: #{tpu_custom_call.1} parent=1 // pred_check_branch
      %96 = sbr.rel (0) target = $region57
    $region56: #{tpu_custom_call.1} parent=1 // pred_region
      %s98 = ssub.s32 1024, 1024
      %99 = vsyncadd [#allocation10], %s98
      %s100 = sshll.u32 [#allocation11], 4
      %s101 = int_to_ptr.vmem [resolvable:$true] %s100
      %106 = dma.hbm_to_vmem [thread:$0]  %s13, 1024, %s101, [#allocation10], 64, 64, 4
    $region57: #{tpu_custom_call.1} parent=1 // pred_fallthru
      _
    // Predicated region
    $region58: #{tpu_custom_call.1} parent=1 // pred_check
      _
    $region59: #{tpu_custom_call.1} parent=1 // pred_check_branch
      %108 = sbr.rel (0) target = $region61
    $region60: #{tpu_custom_call.1} parent=1 // pred_region
      _
    $region61: #{tpu_custom_call.1} parent=1 // pred_fallthru
      _
    // Predicated region
    $region62: #{tpu_custom_call.1} parent=1 // pred_check
      _
    $region63: #{tpu_custom_call.1} parent=1 // pred_check_branch
      %110 = sbr.rel (0) target = $region65
    $region64: #{tpu_custom_call.1} parent=1 // pred_region
      %111 = dma.done [#allocation4], 64
    $region65: #{tpu_custom_call.1} parent=1 // pred_fallthru
      _
    // Predicated region
    $region66: #{tpu_custom_call.1} parent=1 // pred_check
      _
    $region67: #{tpu_custom_call.1} parent=1 // pred_check_branch
      %113 = sbr.rel (0) target = $region69
    $region68: #{tpu_custom_call.1} parent=1 // pred_region
      %114 = dma.done [#allocation7], 1024
    $region69: #{tpu_custom_call.1} parent=1 // pred_fallthru
      _
    // Predicated region
    $region70: #{tpu_custom_call.1} parent=1 // pred_check
      _
    $region71: #{tpu_custom_call.1} parent=1 // pred_check_branch
      %116 = sbr.rel (0) target = $region73
    $region72: #{tpu_custom_call.1} parent=1 // pred_region
      %117 = dma.done [#allocation7], 1024
    $region73: #{tpu_custom_call.1} parent=1 // pred_fallthru
      _
    // Predicated region
    $region74: #{tpu_custom_call.1} parent=1 // pred_check
      _
    $region75: #{tpu_custom_call.1} parent=1 // pred_check_branch
      %119 = sbr.rel (0) target = $region77
    $region76: #{tpu_custom_call.1} parent=1 // pred_region
      %120 = dma.done [#allocation10], 1024
    $region77: #{tpu_custom_call.1} parent=1 // pred_fallthru
      _
    // Predicated region
    $region78: #{tpu_custom_call.1} parent=1 // pred_check
      _
    $region79: #{tpu_custom_call.1} parent=1 // pred_check_branch
      %122 = sbr.rel (0) target = $region81
    $region80: #{tpu_custom_call.1} parent=1 // pred_region
      %123 = dma.done [#allocation10], 1024
    $region81: #{tpu_custom_call.1} parent=1 // pred_fallthru
      _
    %v125 = vld [vmem:[#allocation3] sm:$0xf]
    %v126 = vld [vmem:[#allocation6] sm:$0xf]
    %v127 = vld [vmem:[#allocation6 + $0x4] sm:$0xf]
    %v128 = vld [vmem:[#allocation6 + $0x8] sm:$0xf]
    %v129 = vld [vmem:[#allocation6 + $0xc] sm:$0xf]
    %v130 = vld [vmem:[#allocation6 + $0x10] sm:$0xf]
    %v131 = vld [vmem:[#allocation6 + $0x14] sm:$0xf]
    %v132 = vld [vmem:[#allocation6 + $0x18] sm:$0xf]
    %v133 = vld [vmem:[#allocation6 + $0x1c] sm:$0xf]
    %v134 = vld [vmem:[#allocation6 + $0x20] sm:$0xf]
    %v135 = vld [vmem:[#allocation6 + $0x24] sm:$0xf]
    %v136 = vld [vmem:[#allocation6 + $0x28] sm:$0xf]
    %v137 = vld [vmem:[#allocation6 + $0x2c] sm:$0xf]
    %v138 = vld [vmem:[#allocation6 + $0x30] sm:$0xf]
    %v139 = vld [vmem:[#allocation6 + $0x34] sm:$0xf]
    %v140 = vld [vmem:[#allocation6 + $0x38] sm:$0xf]
    %v141 = vld [vmem:[#allocation6 + $0x3c] sm:$0xf]
    %v142 = vld [vmem:[%s4] sm:$0x1]
    %v144 = vlaneseq
    %v145 = vshrl.u32 %v144, 7
    %v146 = vsub.s32 0, %v145
    %v147 = vrot.slane %v142, %v146
    %v165 = vunpack.c.l.b16 %v126
    %v166 = vunpack.c.l.b16 %v127
    %v167 = vunpack.c.l.b16 %v128
    %v168 = vunpack.c.l.b16 %v129
    %v169 = vunpack.c.l.b16 %v130
    %v170 = vunpack.c.l.b16 %v131
    %v171 = vunpack.c.l.b16 %v132
    %v172 = vunpack.c.l.b16 %v133
    %v173 = vunpack.c.l.b16 %v134
    %v174 = vunpack.c.l.b16 %v135
    %v175 = vunpack.c.l.b16 %v136
    %v176 = vunpack.c.l.b16 %v137
    %v177 = vunpack.c.l.b16 %v138
    %v178 = vunpack.c.l.b16 %v139
    %v179 = vunpack.c.l.b16 %v140
    %v180 = vunpack.c.l.b16 %v141
    %v181 = vpack.c.b16 %v166, %v165
    %v182 = vpack.c.b16 %v168, %v167
    %v183 = vpack.c.b16 %v170, %v169
    %v184 = vpack.c.b16 %v172, %v171
    %v185 = vpack.c.b16 %v174, %v173
    %v186 = vpack.c.b16 %v176, %v175
    %v187 = vpack.c.b16 %v178, %v177
    %v188 = vpack.c.b16 %v180, %v179
    %197 = vmatprep.subr.bf16.mxu0 0
    %198 = vmatpush1.bf16.msra.mxu0 %v181
    %199 = vmatprep.subr.bf16.mxu0 0
    %200 = vmatpush1.bf16.msra.mxu0 %v182
    %201 = vmatprep.subr.bf16.mxu0 0
    %202 = vmatpush1.bf16.msra.mxu0 %v183
    %203 = vmatprep.subr.bf16.mxu0 0
    %204 = vmatpush1.bf16.msra.mxu0 %v184
    %205 = vmatprep.subr.bf16.mxu0 0
    %206 = vmatpush1.bf16.msra.mxu0 %v185
    %207 = vmatprep.subr.bf16.mxu0 0
    %208 = vmatpush1.bf16.msra.mxu0 %v186
    %209 = vmatprep.subr.bf16.mxu0 0
    %210 = vmatpush1.bf16.msra.mxu0 %v187
    %211 = vmatprep.subr.bf16.mxu0 0
    %212 = vmatpush1.bf16.msra.mxu0 %v188
    %213 = vmatprep.subr.bf16.mxu0 0
    %214 = vmatpush1.bf16.msra.mxu0 0
    %215 = vmatprep.subr.bf16.mxu0 0
    %216 = vmatpush1.bf16.msra.mxu0 0
    %217 = vmatprep.subr.bf16.mxu0 0
    %218 = vmatpush1.bf16.msra.mxu0 0
    %219 = vmatprep.subr.bf16.mxu0 0
    %220 = vmatpush1.bf16.msra.mxu0 0
    %221 = vmatprep.subr.bf16.mxu0 0
    %222 = vmatpush1.bf16.msra.mxu0 0
    %223 = vmatprep.subr.bf16.mxu0 0
    %224 = vmatpush1.bf16.msra.mxu0 0
    %225 = vmatprep.subr.bf16.mxu0 0
    %226 = vmatpush1.bf16.msra.mxu0 0
    %227 = vmatprep.subr.bf16.mxu0 0
    %228 = vmatpush1.bf16.msra.mxu0 0
    %229 = vmatprep.mubr.bf16.mxu0 0
    %230 = vmatmul.mubr.bf16.gmra.mrb[0].mxu0 %v125
    %v231 = vpop.f32.mrb[0].mxu0
    %v232 = vadd.f32 %v147, %v231
    %v233 = vpop.f32.mrb[0].mxu0
    %v234 = vpop.f32.mrb[0].mxu0
    %v235 = vpop.f32.mrb[0].mxu0
    %236 = vdwg.mxu0
    %237 = vadd.xlane.f32.xlu0 %v232
    %v238 = vpop.xlane.xlu0 %237
    %v239 = vmul.f32 %v238, 0.0078125
    %v240 = vmul.f32 %v232, %v232
    %241 = vadd.xlane.f32.xlu0 %v240
    %v242 = vpop.xlane.xlu0 %241
    %v243 = vmul.f32 %v242, 0.0078125
    %v244 = vmul.f32 %v239, %v239
    %v245 = vsub.f32 %v243, %v244
    %v246 = vsub.f32 %v232, %v239
    %v247 = vadd.f32 %v245, 1e-05
    %v248 = vrsqrt.pop %v247
    %v249 = vmul.f32 %v246, %v248
    %v250 = vld [vmem:[%s5] sm:$0x1]
    %v252 = vlaneseq
    %v253 = vshrl.u32 %v252, 7
    %v254 = vsub.s32 0, %v253
    %v255 = vrot.slane %v250, %v254
    %v257 = vmul.f32 %v249, %v255
    %v258 = vld [vmem:[%s6] sm:$0x1]
    %v260 = vlaneseq
    %v261 = vshrl.u32 %v260, 7
    %v262 = vsub.s32 0, %v261
    %v263 = vrot.slane %v258, %v262
    %v265 = vadd.f32 %v257, %v263
    %v266 = vmul.f32 %v265, 0.5
    %v267 = vmul.f32 %v265, 0.70710677
    %vm268 = vcmp.ge.f32.partialorder %v267, 0.0
    %v269 = vsel %vm268, 1.0, -1.0
    %v270 = vand.u32 2147483647, %v267
    %v271 = vmul.f32 %v270, 0.3275911
    %v272 = vadd.f32 %v271, 1.0
    %v273 = vrcp.pop %v272
    %v274 = vmul.f32 %v273, 1.0614054
    %v275 = vadd.f32 %v274, -1.4531521
    %v276 = vmul.f32 %v275, %v273
    %v277 = vadd.f32 %v276, 1.4214138
    %v278 = vmul.f32 %v277, %v273
    %v279 = vadd.f32 %v278, -0.28449672
    %v280 = vmul.f32 %v279, %v273
    %v281 = vadd.f32 %v280, 0.2548296
    %v282 = vmul.f32 %v281, %v273
    %v283 = vsub.f32 0.0, %v270
    %v284 = vmul.f32 %v283, %v270
    %v285 = vmul.f32 %v284, 1.442695
    %v286 = vpow.pop %v285
    %v287 = vmul.f32 %v282, %v286
    %v288 = vsub.f32 1.0, %v287
    %v289 = vmul.f32 %v269, %v288
    %v290 = vadd.f32 %v289, 1.0
    %v291 = vmul.f32 %v266, %v290
    %v292 = vpack.c.bf16 %v291, %v291
    %v293 = vld [vmem:[#allocation8] sm:$0xf]
    %v294 = vld [vmem:[#allocation8 + $0x4] sm:$0xf]
    %v295 = vld [vmem:[#allocation8 + $0x8] sm:$0xf]
    %v296 = vld [vmem:[#allocation8 + $0xc] sm:$0xf]
    %v297 = vld [vmem:[#allocation8 + $0x10] sm:$0xf]
    %v298 = vld [vmem:[#allocation8 + $0x14] sm:$0xf]
    %v299 = vld [vmem:[#allocation8 + $0x18] sm:$0xf]
    %v300 = vld [vmem:[#allocation8 + $0x1c] sm:$0xf]
    %v301 = vld [vmem:[#allocation8 + $0x20] sm:$0xf]
    %v302 = vld [vmem:[#allocation8 + $0x24] sm:$0xf]
    %v303 = vld [vmem:[#allocation8 + $0x28] sm:$0xf]
    %v304 = vld [vmem:[#allocation8 + $0x2c] sm:$0xf]
    %v305 = vld [vmem:[#allocation8 + $0x30] sm:$0xf]
    %v306 = vld [vmem:[#allocation8 + $0x34] sm:$0xf]
    %v307 = vld [vmem:[#allocation8 + $0x38] sm:$0xf]
    %v308 = vld [vmem:[#allocation8 + $0x3c] sm:$0xf]
    %v309 = vld [vmem:[%s8] sm:$0x1]
    %v311 = vlaneseq
    %v312 = vshrl.u32 %v311, 7
    %v313 = vsub.s32 0, %v312
    %v314 = vrot.slane %v309, %v313
    %v332 = vunpack.c.l.b16 %v293
    %v333 = vunpack.c.l.b16 %v294
    %v334 = vunpack.c.l.b16 %v295
    %v335 = vunpack.c.l.b16 %v296
    %v336 = vunpack.c.l.b16 %v297
    %v337 = vunpack.c.l.b16 %v298
    %v338 = vunpack.c.l.b16 %v299
    %v339 = vunpack.c.l.b16 %v300
    %v340 = vunpack.c.l.b16 %v301
    %v341 = vunpack.c.l.b16 %v302
    %v342 = vunpack.c.l.b16 %v303
    %v343 = vunpack.c.l.b16 %v304
    %v344 = vunpack.c.l.b16 %v305
    %v345 = vunpack.c.l.b16 %v306
    %v346 = vunpack.c.l.b16 %v307
    %v347 = vunpack.c.l.b16 %v308
    %v348 = vpack.c.b16 %v333, %v332
    %v349 = vpack.c.b16 %v335, %v334
    %v350 = vpack.c.b16 %v337, %v336
    %v351 = vpack.c.b16 %v339, %v338
    %v352 = vpack.c.b16 %v341, %v340
    %v353 = vpack.c.b16 %v343, %v342
    %v354 = vpack.c.b16 %v345, %v344
    %v355 = vpack.c.b16 %v347, %v346
    %364 = vmatprep.subr.bf16.mxu0 0
    %365 = vmatpush1.bf16.msra.mxu0 %v348
    %366 = vmatprep.subr.bf16.mxu0 0
    %367 = vmatpush1.bf16.msra.mxu0 %v349
    %368 = vmatprep.subr.bf16.mxu0 0
    %369 = vmatpush1.bf16.msra.mxu0 %v350
    %370 = vmatprep.subr.bf16.mxu0 0
    %371 = vmatpush1.bf16.msra.mxu0 %v351
    %372 = vmatprep.subr.bf16.mxu0 0
    %373 = vmatpush1.bf16.msra.mxu0 %v352
    %374 = vmatprep.subr.bf16.mxu0 0
    %375 = vmatpush1.bf16.msra.mxu0 %v353
    %376 = vmatprep.subr.bf16.mxu0 0
    %377 = vmatpush1.bf16.msra.mxu0 %v354
    %378 = vmatprep.subr.bf16.mxu0 0
    %379 = vmatpush1.bf16.msra.mxu0 %v355
    %380 = vmatprep.subr.bf16.mxu0 0
    %381 = vmatpush1.bf16.msra.mxu0 0
    %382 = vmatprep.subr.bf16.mxu0 0
    %383 = vmatpush1.bf16.msra.mxu0 0
    %384 = vmatprep.subr.bf16.mxu0 0
    %385 = vmatpush1.bf16.msra.mxu0 0
    %386 = vmatprep.subr.bf16.mxu0 0
    %387 = vmatpush1.bf16.msra.mxu0 0
    %388 = vmatprep.subr.bf16.mxu0 0
    %389 = vmatpush1.bf16.msra.mxu0 0
    %390 = vmatprep.subr.bf16.mxu0 0
    %391 = vmatpush1.bf16.msra.mxu0 0
    %392 = vmatprep.subr.bf16.mxu0 0
    %393 = vmatpush1.bf16.msra.mxu0 0
    %394 = vmatprep.subr.bf16.mxu0 0
    %395 = vmatpush1.bf16.msra.mxu0 0
    %396 = vmatprep.mubr.bf16.mxu0 0
    %397 = vmatmul.mubr.bf16.gmra.mrb[0].mxu0 %v292
    %v398 = vpop.f32.mrb[0].mxu0
    %v399 = vadd.f32 %v314, %v398
    %v400 = vpop.f32.mrb[0].mxu0
    %v401 = vpop.f32.mrb[0].mxu0
    %v402 = vpop.f32.mrb[0].mxu0
    %403 = vdwg.mxu0
    %v404 = vld [vmem:[%s2] sm:$0xf]
    %v405 = vld [vmem:[#allocation9] sm:$0xf]
    %v406 = vld [vmem:[#allocation9 + $0x4] sm:$0xf]
    %v407 = vld [vmem:[#allocation9 + $0x8] sm:$0xf]
    %v408 = vld [vmem:[#allocation9 + $0xc] sm:$0xf]
    %v409 = vld [vmem:[#allocation9 + $0x10] sm:$0xf]
    %v410 = vld [vmem:[#allocation9 + $0x14] sm:$0xf]
    %v411 = vld [vmem:[#allocation9 + $0x18] sm:$0xf]
    %v412 = vld [vmem:[#allocation9 + $0x1c] sm:$0xf]
    %v413 = vld [vmem:[#allocation9 + $0x20] sm:$0xf]
    %v414 = vld [vmem:[#allocation9 + $0x24] sm:$0xf]
    %v415 = vld [vmem:[#allocation9 + $0x28] sm:$0xf]
    %v416 = vld [vmem:[#allocation9 + $0x2c] sm:$0xf]
    %v417 = vld [vmem:[#allocation9 + $0x30] sm:$0xf]
    %v418 = vld [vmem:[#allocation9 + $0x34] sm:$0xf]
    %v419 = vld [vmem:[#allocation9 + $0x38] sm:$0xf]
    %v420 = vld [vmem:[#allocation9 + $0x3c] sm:$0xf]
    %v421 = vld [vmem:[%s10] sm:$0x1]
    %v423 = vlaneseq
    %v424 = vshrl.u32 %v423, 7
    %v425 = vsub.s32 0, %v424
    %v426 = vrot.slane %v421, %v425
    %v444 = vunpack.c.l.b16 %v405
    %v445 = vunpack.c.l.b16 %v406
    %v446 = vunpack.c.l.b16 %v407
    %v447 = vunpack.c.l.b16 %v408
    %v448 = vunpack.c.l.b16 %v409
    %v449 = vunpack.c.l.b16 %v410
    %v450 = vunpack.c.l.b16 %v411
    %v451 = vunpack.c.l.b16 %v412
    %v452 = vunpack.c.l.b16 %v413
    %v453 = vunpack.c.l.b16 %v414
    %v454 = vunpack.c.l.b16 %v415
    %v455 = vunpack.c.l.b16 %v416
    %v456 = vunpack.c.l.b16 %v417
    %v457 = vunpack.c.l.b16 %v418
    %v458 = vunpack.c.l.b16 %v419
    %v459 = vunpack.c.l.b16 %v420
    %v460 = vpack.c.b16 %v445, %v444
    %v461 = vpack.c.b16 %v447, %v446
    %v462 = vpack.c.b16 %v449, %v448
    %v463 = vpack.c.b16 %v451, %v450
    %v464 = vpack.c.b16 %v453, %v452
    %v465 = vpack.c.b16 %v455, %v454
    %v466 = vpack.c.b16 %v457, %v456
    %v467 = vpack.c.b16 %v459, %v458
    %476 = vmatprep.subr.bf16.mxu0 0
    %477 = vmatpush1.bf16.msra.mxu0 %v460
    %478 = vmatprep.subr.bf16.mxu0 0
    %479 = vmatpush1.bf16.msra.mxu0 %v461
    %480 = vmatprep.subr.bf16.mxu0 0
    %481 = vmatpush1.bf16.msra.mxu0 %v462
    %482 = vmatprep.subr.bf16.mxu0 0
    %483 = vmatpush1.bf16.msra.mxu0 %v463
    %484 = vmatprep.subr.bf16.mxu0 0
    %485 = vmatpush1.bf16.msra.mxu0 %v464
    %486 = vmatprep.subr.bf16.mxu0 0
    %487 = vmatpush1.bf16.msra.mxu0 %v465
    %488 = vmatprep.subr.bf16.mxu0 0
    %489 = vmatpush1.bf16.msra.mxu0 %v466
    %490 = vmatprep.subr.bf16.mxu0 0
    %491 = vmatpush1.bf16.msra.mxu0 %v467
    %492 = vmatprep.subr.bf16.mxu0 0
    %493 = vmatpush1.bf16.msra.mxu0 0
    %494 = vmatprep.subr.bf16.mxu0 0
    %495 = vmatpush1.bf16.msra.mxu0 0
    %496 = vmatprep.subr.bf16.mxu0 0
    %497 = vmatpush1.bf16.msra.mxu0 0
    %498 = vmatprep.subr.bf16.mxu0 0
    %499 = vmatpush1.bf16.msra.mxu0 0
    %500 = vmatprep.subr.bf16.mxu0 0
    %501 = vmatpush1.bf16.msra.mxu0 0
    %502 = vmatprep.subr.bf16.mxu0 0
    %503 = vmatpush1.bf16.msra.mxu0 0
    %504 = vmatprep.subr.bf16.mxu0 0
    %505 = vmatpush1.bf16.msra.mxu0 0
    %506 = vmatprep.subr.bf16.mxu0 0
    %507 = vmatpush1.bf16.msra.mxu0 0
    %508 = vmatprep.mubr.bf16.mxu0 0
    %509 = vmatmul.mubr.bf16.gmra.mrb[0].mxu0 %v404
    %v510 = vpop.f32.mrb[0].mxu0
    %v511 = vadd.f32 %v426, %v510
    %v512 = vpop.f32.mrb[0].mxu0
    %v513 = vpop.f32.mrb[0].mxu0
    %v514 = vpop.f32.mrb[0].mxu0
    %515 = vdwg.mxu0
    %516 = vadd.xlane.f32.xlu0 %v511
    %v517 = vpop.xlane.xlu0 %516
    %v518 = vmul.f32 %v517, 0.0078125
    %v519 = vmul.f32 %v511, %v511
    %520 = vadd.xlane.f32.xlu0 %v519
    %v521 = vpop.xlane.xlu0 %520
    %v522 = vmul.f32 %v521, 0.0078125
    %v523 = vmul.f32 %v518, %v518
    %v524 = vsub.f32 %v522, %v523
    %v525 = vsub.f32 %v511, %v518
    %v526 = vadd.f32 %v524, 1e-05
    %v527 = vrsqrt.pop %v526
    %v528 = vmul.f32 %v525, %v527
    %v529 = vld [vmem:[%s11] sm:$0x1]
    %v531 = vlaneseq
    %v532 = vshrl.u32 %v531, 7
    %v533 = vsub.s32 0, %v532
    %v534 = vrot.slane %v529, %v533
    %v536 = vmul.f32 %v528, %v534
    %v537 = vld [vmem:[%s12] sm:$0x1]
    %v539 = vlaneseq
    %v540 = vshrl.u32 %v539, 7
    %v541 = vsub.s32 0, %v540
    %v542 = vrot.slane %v537, %v541
    %v544 = vadd.f32 %v536, %v542
    %v545 = vmul.f32 %v544, 0.5
    %v546 = vmul.f32 %v544, 0.70710677
    %vm547 = vcmp.ge.f32.partialorder %v546, 0.0
    %v548 = vsel %vm547, 1.0, -1.0
    %v549 = vand.u32 2147483647, %v546
    %v550 = vmul.f32 %v549, 0.3275911
    %v551 = vadd.f32 %v550, 1.0
    %v552 = vrcp.pop %v551
    %v553 = vmul.f32 %v552, 1.0614054
    %v554 = vadd.f32 %v553, -1.4531521
    %v555 = vmul.f32 %v554, %v552
    %v556 = vadd.f32 %v555, 1.4214138
    %v557 = vmul.f32 %v556, %v552
    %v558 = vadd.f32 %v557, -0.28449672
    %v559 = vmul.f32 %v558, %v552
    %v560 = vadd.f32 %v559, 0.2548296
    %v561 = vmul.f32 %v560, %v552
    %v562 = vsub.f32 0.0, %v549
    %v563 = vmul.f32 %v562, %v549
    %v564 = vmul.f32 %v563, 1.442695
    %v565 = vpow.pop %v564
    %v566 = vmul.f32 %v561, %v565
    %v567 = vsub.f32 1.0, %v566
    %v568 = vmul.f32 %v548, %v567
    %v569 = vadd.f32 %v568, 1.0
    %v570 = vmul.f32 %v545, %v569
    %v571 = vpack.c.bf16 %v570, %v570
    %v572 = vld [vmem:[#allocation11] sm:$0xf]
    %v573 = vld [vmem:[#allocation11 + $0x4] sm:$0xf]
    %v574 = vld [vmem:[#allocation11 + $0x8] sm:$0xf]
    %v575 = vld [vmem:[#allocation11 + $0xc] sm:$0xf]
    %v576 = vld [vmem:[#allocation11 + $0x10] sm:$0xf]
    %v577 = vld [vmem:[#allocation11 + $0x14] sm:$0xf]
    %v578 = vld [vmem:[#allocation11 + $0x18] sm:$0xf]
    %v579 = vld [vmem:[#allocation11 + $0x1c] sm:$0xf]
    %v580 = vld [vmem:[#allocation11 + $0x20] sm:$0xf]
    %v581 = vld [vmem:[#allocation11 + $0x24] sm:$0xf]
    %v582 = vld [vmem:[#allocation11 + $0x28] sm:$0xf]
    %v583 = vld [vmem:[#allocation11 + $0x2c] sm:$0xf]
    %v584 = vld [vmem:[#allocation11 + $0x30] sm:$0xf]
    %v585 = vld [vmem:[#allocation11 + $0x34] sm:$0xf]
    %v586 = vld [vmem:[#allocation11 + $0x38] sm:$0xf]
    %v587 = vld [vmem:[#allocation11 + $0x3c] sm:$0xf]
    %v588 = vld [vmem:[%s14] sm:$0x1]
    %v590 = vlaneseq
    %v591 = vshrl.u32 %v590, 7
    %v592 = vsub.s32 0, %v591
    %v593 = vrot.slane %v588, %v592
    %v611 = vunpack.c.l.b16 %v572
    %v612 = vunpack.c.l.b16 %v573
    %v613 = vunpack.c.l.b16 %v574
    %v614 = vunpack.c.l.b16 %v575
    %v615 = vunpack.c.l.b16 %v576
    %v616 = vunpack.c.l.b16 %v577
    %v617 = vunpack.c.l.b16 %v578
    %v618 = vunpack.c.l.b16 %v579
    %v619 = vunpack.c.l.b16 %v580
    %v620 = vunpack.c.l.b16 %v581
    %v621 = vunpack.c.l.b16 %v582
    %v622 = vunpack.c.l.b16 %v583
    %v623 = vunpack.c.l.b16 %v584
    %v624 = vunpack.c.l.b16 %v585
    %v625 = vunpack.c.l.b16 %v586
    %v626 = vunpack.c.l.b16 %v587
    %v627 = vpack.c.b16 %v612, %v611
    %v628 = vpack.c.b16 %v614, %v613
    %v629 = vpack.c.b16 %v616, %v615
    %v630 = vpack.c.b16 %v618, %v617
    %v631 = vpack.c.b16 %v620, %v619
    %v632 = vpack.c.b16 %v622, %v621
    %v633 = vpack.c.b16 %v624, %v623
    %v634 = vpack.c.b16 %v626, %v625
    %643 = vmatprep.subr.bf16.mxu0 0
    %644 = vmatpush1.bf16.msra.mxu0 %v627
    %645 = vmatprep.subr.bf16.mxu0 0
    %646 = vmatpush1.bf16.msra.mxu0 %v628
    %647 = vmatprep.subr.bf16.mxu0 0
    %648 = vmatpush1.bf16.msra.mxu0 %v629
    %649 = vmatprep.subr.bf16.mxu0 0
    %650 = vmatpush1.bf16.msra.mxu0 %v630
    %651 = vmatprep.subr.bf16.mxu0 0
    %652 = vmatpush1.bf16.msra.mxu0 %v631
    %653 = vmatprep.subr.bf16.mxu0 0
    %654 = vmatpush1.bf16.msra.mxu0 %v632
    %655 = vmatprep.subr.bf16.mxu0 0
    %656 = vmatpush1.bf16.msra.mxu0 %v633
    %657 = vmatprep.subr.bf16.mxu0 0
    %658 = vmatpush1.bf16.msra.mxu0 %v634
    %659 = vmatprep.subr.bf16.mxu0 0
    %660 = vmatpush1.bf16.msra.mxu0 0
    %661 = vmatprep.subr.bf16.mxu0 0
    %662 = vmatpush1.bf16.msra.mxu0 0
    %663 = vmatprep.subr.bf16.mxu0 0
    %664 = vmatpush1.bf16.msra.mxu0 0
    %665 = vmatprep.subr.bf16.mxu0 0
    %666 = vmatpush1.bf16.msra.mxu0 0
    %667 = vmatprep.subr.bf16.mxu0 0
    %668 = vmatpush1.bf16.msra.mxu0 0
    %669 = vmatprep.subr.bf16.mxu0 0
    %670 = vmatpush1.bf16.msra.mxu0 0
    %671 = vmatprep.subr.bf16.mxu0 0
    %672 = vmatpush1.bf16.msra.mxu0 0
    %673 = vmatprep.subr.bf16.mxu0 0
    %674 = vmatpush1.bf16.msra.mxu0 0
    %675 = vmatprep.mubr.bf16.mxu0 0
    %676 = vmatmul.mubr.bf16.gmra.mrb[0].mxu0 %v571
    %v677 = vpop.f32.mrb[0].mxu0
    %v678 = vadd.f32 %v593, %v677
    %v679 = vpop.f32.mrb[0].mxu0
    %v680 = vpop.f32.mrb[0].mxu0
    %v681 = vpop.f32.mrb[0].mxu0
    %682 = vdwg.mxu0
    %683 = vst [vmem:[#allocation12] sm:$0xff] %v399
    %684 = vst [vmem:[#allocation13] sm:$0xff] %v678
    %s685 = sld [smem:[#allocation2]]
    %v686 = vmul.f32 %v399, %v399
    %687 = vadd.xlane.f32.xlu0 %v686
    %v688 = vpop.xlane.xlu0 %687
    %v689 = vmax.f32 %v688, 1e-24
    %v690 = vrsqrt.pop %v689
    %v691 = vmul.f32 %v678, %v678
    %692 = vadd.xlane.f32.xlu0 %v691
    %v693 = vpop.xlane.xlu0 %692
    %v694 = vmax.f32 %v693, 1e-24
    %v695 = vrsqrt.pop %v694
    %v696 = vstv %s685
    %v697 = vmul.f32 %v696, %v690
    %v698 = vmul.f32 %v399, %v697
    %699 = vst [vmem:[#allocation15] sm:$0xff] %v698
    %v700 = vmul.f32 %v678, %v695
    %701 = vst [vmem:[#allocation16] sm:$0xff] %v700
    // Predicated region
    $region82: #{tpu_custom_call.1} parent=1 // pred_check
      _
    $region83: #{tpu_custom_call.1} parent=1 // pred_check_branch
      %703 = sbr.rel (0) target = $region85
    $region84: #{tpu_custom_call.1} parent=1 // pred_region
      %s705 = ssub.s32 128, 128
      %706 = vsyncadd [#allocation5], %s705
      %s708 = sshll.u32 [#allocation12], 4
      %s709 = int_to_ptr.vmem [resolvable:$true] %s708
      %711 = dma.vmem_to_hbm [thread:$0]  %s709, 128, %s15, [#allocation5]
    $region85: #{tpu_custom_call.1} parent=1 // pred_fallthru
      _
    // Predicated region
    $region86: #{tpu_custom_call.1} parent=1 // pred_check
      _
    $region87: #{tpu_custom_call.1} parent=1 // pred_check_branch
      %713 = sbr.rel (0) target = $region89
    $region88: #{tpu_custom_call.1} parent=1 // pred_region
      %s715 = ssub.s32 128, 128
      %716 = vsyncadd [#allocation14], %s715
      %s718 = sshll.u32 [#allocation13], 4
      %s719 = int_to_ptr.vmem [resolvable:$true] %s718
      %721 = dma.vmem_to_hbm [thread:$0]  %s719, 128, %s16, [#allocation14]
    $region89: #{tpu_custom_call.1} parent=1 // pred_fallthru
      _
    // Predicated region
    $region90: #{tpu_custom_call.1} parent=1 // pred_check
      _
    $region91: #{tpu_custom_call.1} parent=1 // pred_check_branch
      %723 = sbr.rel (0) target = $region93
    $region92: #{tpu_custom_call.1} parent=1 // pred_region
      %s725 = ssub.s32 128, 128
      %726 = vsyncadd [#allocation14], %s725
      %s728 = sshll.u32 [#allocation15], 4
      %s729 = int_to_ptr.vmem [resolvable:$true] %s728
      %731 = dma.vmem_to_hbm [thread:$0]  %s729, 128, %s17, [#allocation14]
    $region93: #{tpu_custom_call.1} parent=1 // pred_fallthru
      _
    // Predicated region
    $region94: #{tpu_custom_call.1} parent=1 // pred_check
      _
    $region95: #{tpu_custom_call.1} parent=1 // pred_check_branch
      %733 = sbr.rel (0) target = $region97
    $region96: #{tpu_custom_call.1} parent=1 // pred_region
      %s735 = ssub.s32 128, 128
      %736 = vsyncadd [#allocation17], %s735
      %s738 = sshll.u32 [#allocation16], 4
      %s739 = int_to_ptr.vmem [resolvable:$true] %s738
      %741 = dma.vmem_to_hbm [thread:$0]  %s739, 128, %s18, [#allocation17]
    $region97: #{tpu_custom_call.1} parent=1 // pred_fallthru
      _
    // Predicated region
    $region98: #{tpu_custom_call.1} parent=1 // pred_check
      _
    $region99: #{tpu_custom_call.1} parent=1 // pred_check_branch
      %743 = sbr.rel (0) target = $region101
    $region100: #{tpu_custom_call.1} parent=1 // pred_region
      %744 = dma.done [#allocation5], 128
    $region101: #{tpu_custom_call.1} parent=1 // pred_fallthru
      _
    // Predicated region
    $region102: #{tpu_custom_call.1} parent=1 // pred_check
      _
    $region103: #{tpu_custom_call.1} parent=1 // pred_check_branch
      %746 = sbr.rel (0) target = $region105
    $region104: #{tpu_custom_call.1} parent=1 // pred_region
      %747 = dma.done [#allocation14], 128
    $region105: #{tpu_custom_call.1} parent=1 // pred_fallthru
      _
    // Predicated region
    $region106: #{tpu_custom_call.1} parent=1 // pred_check
      _
    $region107: #{tpu_custom_call.1} parent=1 // pred_check_branch
      %749 = sbr.rel (0) target = $region109
    $region108: #{tpu_custom_call.1} parent=1 // pred_region
      %750 = dma.done [#allocation14], 128
    $region109: #{tpu_custom_call.1} parent=1 // pred_fallthru
      _
    // Predicated region
    $region110: #{tpu_custom_call.1} parent=1 // pred_check
      _
    $region111: #{tpu_custom_call.1} parent=1 // pred_check_branch
      %752 = sbr.rel (0) target = $region113
    $region112: #{tpu_custom_call.1} parent=1 // pred_region
      %753 = dma.done [#allocation17], 128
    $region113: #{tpu_custom_call.1} parent=1 // pred_fallthru
      _
    %754 = vsyncpa [#allocation4], 1
    %755 = vsyncpa [#allocation7], 1
    %756 = vsyncpa [#allocation10], 1
    %757 = vsyncpa [#allocation5], 1
    %758 = vsyncpa [#allocation14], 1
    %759 = vsyncpa [#allocation17], 1

</llo_original>
